<compile_context>
chip_gen: v6e
topology: v6e:2x2x1
jax: 0.10.0
libtpu: 0.0.40
codegen_flags: <defaults>
</compile_context>

<pallas_src>
import jax
import jax.numpy as jnp
from jax.experimental import pallas as pl
from jax.experimental.pallas import tpu as pltpu


# ----------------------------------------------------------------------------
# Shared math
# ----------------------------------------------------------------------------
def _gelu(x):
    # tanh-approximate GELU (EUP tanh, f32 on every chip generation).
    c = 0.7978845608028654  # sqrt(2/pi)
    return 0.5 * x * (1.0 + jnp.tanh(c * (x + 0.044715 * x * x * x)))


# ----------------------------------------------------------------------------
# Kernel (feature-major / transposed layout: features on sublanes, batch on lanes)
# ----------------------------------------------------------------------------
def _make_kernel(D, W, X, L, P):
    """Static dims: D=depth_model, W=input_width, X=x_dim, L=2W (B1 fan-in), P=pred dim."""
    bf16 = jnp.bfloat16
    f32 = jnp.float32

    # bias slab row offsets: [f1_b1 | f2_b1 | b1_b1 | f1_b2 | f2_b2 | b1_b2]
    o_f1b1, o_f2b1, o_b1b1 = 0, D, 2 * D
    o_f1b2, o_f2b2, o_b1b2 = 3 * D, 3 * D + W, 3 * D + 2 * W

    def kernel(xT_ref, wa_ref, wb_ref, b_ref, out_ref):
        # x^T batch tile: (X, TB) f32 -> bf16 MXU operand (accumulation stays f32).
        x = xT_ref[...].astype(bf16)

        # ---- F1: z_t^T = W2^T @ gelu(W1^T @ x^T + b1) + b2 ----
        h = jnp.dot(wa_ref[0:D, 0:X].astype(bf16), x,
                    preferred_element_type=f32) + b_ref[o_f1b1:o_f1b1 + D]
        h = _gelu(h)
        z1 = jnp.dot(wb_ref[0:W, :].astype(bf16), h.astype(bf16),
                     preferred_element_type=f32) + b_ref[o_f1b2:o_f1b2 + W]   # (W, TB)

        # ---- F2: z_t2^T ----
        h = jnp.dot(wa_ref[D:2 * D, 0:W].astype(bf16), z1.astype(bf16),
                    preferred_element_type=f32) + b_ref[o_f2b1:o_f2b1 + D]
        h = _gelu(h)
        z2 = jnp.dot(wb_ref[W:2 * W, :].astype(bf16), h.astype(bf16),
                     preferred_element_type=f32) + b_ref[o_f2b2:o_f2b2 + W]   # (W, TB)

        # ---- latent^T = [z_t^T ; z_t2^T]: sublane concat at an 8-row boundary ----
        latent = jnp.concatenate([z1, z2], axis=0)                            # (L, TB) f32

        # ---- B1: single K=L dot on the assembled latent ----
        h = jnp.dot(wa_ref[2 * D:3 * D, 0:L].astype(bf16), latent.astype(bf16),
                    preferred_element_type=f32) + b_ref[o_b1b1:o_b1b1 + D]
        h = _gelu(h)
        pred = jnp.dot(wb_ref[2 * W:2 * W + P, :].astype(bf16), h.astype(bf16),
                       preferred_element_type=f32) + b_ref[o_b1b2:o_b1b2 + P]  # (P, TB)

        # ---- single fused, full-lane-width store: [latent ; pred] ----
        out_ref[...] = jnp.concatenate([latent, pred], axis=0).astype(out_ref.dtype)

    return kernel


# ----------------------------------------------------------------------------
# Wrapper
# ----------------------------------------------------------------------------
def _pack_params(params):
    """Pack the 12 tiny parameter arrays into 3 slabs (transposed layout)."""
    f1, f2, b1p = params
    f1w1, f1b1, f1w2, f1b2 = [jnp.asarray(a, jnp.float32) for a in f1]
    f2w1, f2b1, f2w2, f2b2 = [jnp.asarray(a, jnp.float32) for a in f2]
    b1w1, b1b1, b1w2, b1b2 = [jnp.asarray(a, jnp.float32) for a in b1p]

    D = f1w1.shape[1]          # depth_model
    W = f1w2.shape[1]          # input_width (F1/F2 output width)
    X = f1w1.shape[0]          # x_dim = 2*input_width + input_merge_width
    L = b1w1.shape[0]          # 2*input_width (B1 fan-in)
    P = b1w2.shape[1]          # pred dim = 2*input_width + input_merge_width
    Kmax = max(X, W, L)

    def pad_cols(wT, k):
        return jnp.pad(wT, ((0, 0), (0, Kmax - k)))

    # First-layer weights, transposed to (D, fan_in), fan_in padded to Kmax.
    wa = jnp.concatenate([pad_cols(f1w1.T, X),
                          pad_cols(f2w1.T, W),
                          pad_cols(b1w1.T, L)], axis=0)            # (3D, Kmax)
    # Second-layer weights, transposed to (fan_out, D).
    wb = jnp.concatenate([f1w2.T, f2w2.T, b1w2.T], axis=0)         # (2W+P, D)
    # Bias slab (one column, broadcast across lanes in-kernel).
    bias = jnp.concatenate([f1b1.T, f2b1.T, b1b1.T,
                            f1b2.T, f2b2.T, b1b2.T], axis=0)       # (3D+2W+P, 1)
    return wa, wb, bias, dict(D=D, W=W, X=X, L=L, P=P)


def two_forward_one_back(x_t, params, *, batch_tile=1024):
    """x_t: (B, 2*input_width + input_merge_width) float32.

    Returns (latent, last_pred), matching `self.last_latent` / `self.last_pred`.
    """
    B, x_dim = x_t.shape
    wa, wb, bias, dims = _pack_params(params)
    D, W, X, L, P = dims["D"], dims["W"], dims["X"], dims["L"], dims["P"]
    assert x_dim == X, "x feature width must match F1 fan-in"
    out_dim = L + P

    # Tile selection: one big tile when the whole batch fits (no per-step
    # overhead, no pointless cross-TC split of tiny work); otherwise large
    # 128-aligned tiles.  Footprint is << VMEM on every generation, so no
    # per-chip re-derivation is needed.
    if B <= batch_tile:
        TB = B
    else:
        TB = batch_tile
        assert TB % 128 == 0 and B % TB == 0, \
            "batch must be a multiple of a 128-aligned batch_tile"
    grid = (B // TB,)

    # Boundary layout plumbing: batch -> lanes.
    xT = x_t.T                                                     # (X, B)

    kernel = _make_kernel(D, W, X, L, P)
    fused_T = pl.pallas_call(
        kernel,
        out_shape=jax.ShapeDtypeStruct((out_dim, B), jnp.float32),
        grid_spec=pl.GridSpec(
            grid=grid,
            in_specs=[
                pl.BlockSpec((X, TB), lambda i: (0, i)),           # x^T batch tile
                pl.BlockSpec(wa.shape, lambda i: (0, 0)),          # VMEM-resident slabs
                pl.BlockSpec(wb.shape, lambda i: (0, 0)),
                pl.BlockSpec(bias.shape, lambda i: (0, 0)),
            ],
            out_specs=pl.BlockSpec((out_dim, TB), lambda i: (0, i)),
        ),
        compiler_params=pltpu.CompilerParams(
            # Batch tiles are independent -> shard across TCs on v7x megacore.
            dimension_semantics=("parallel",),
        ),
    )(xT, wa, wb, bias)

    # Wrapper-side slicing/transpose of the fused feature-major slab.
    latent = fused_T[:L, :].T                                      # (B, 2W)
    pred = fused_T[L:, :].T                                        # (B, P)
    return latent, pred


# ----------------------------------------------------------------------------
# Deterministic parameter construction (matching the module's __init__ widths)
# ----------------------------------------------------------------------------
def make_block_params(key, in_width, depth_model, output_width):
    k1, k2 = jax.random.split(key)
    scale1 = 1.0 / jnp.sqrt(jnp.float32(in_width))
    scale2 = 1.0 / jnp.sqrt(jnp.float32(depth_model))
    w1 = jax.random.normal(k1, (in_width, depth_model), jnp.float32) * scale1
    b1 = jnp.zeros((1, depth_model), jnp.float32)
    w2 = jax.random.normal(k2, (depth_model, output_width), jnp.float32) * scale2
    b2 = jnp.zeros((1, output_width), jnp.float32)
    return (w1, b1, w2, b2)


def pure_jax_reference(x, params):
    """Batch-major reference with the same bf16-operand / f32-accumulate dots."""
    bf16 = jnp.bfloat16

    def mlp(x, p):
        w1, b1_, w2, b2 = p
        h = jnp.dot(x.astype(bf16), w1.astype(bf16),
                    preferred_element_type=jnp.float32) + b1_
        h = _gelu(h)
        return jnp.dot(h.astype(bf16), w2.astype(bf16),
                       preferred_element_type=jnp.float32) + b2

    f1, f2, b1p = params
    z = mlp(x, f1)
    z2 = mlp(z, f2)
    latent = jnp.concatenate([z, z2], axis=1)
    pred = mlp(latent, b1p)
    return latent, pred


if __name__ == "__main__":
    # Shapes consistent with the module:
    #   input_width=8, input_merge_width=0, depth_model=32
    #   => x_t feature dim = 2*input_width + input_merge_width = 16
    batch = 256                 # <= batch_tile -> single grid step (grid=(1,))
    input_width = 8
    input_merge_width = 0
    depth_model = 32
    x_dim = 2 * input_width + input_merge_width  # 16

    key = jax.random.PRNGKey(0)
    kx, kf1, kf2, kb1 = jax.random.split(key, 4)

    x_t = jax.random.normal(kx, (batch, x_dim), jnp.float32)

    # blocks['F1'] : output_width = input_width
    f1 = make_block_params(kf1, x_dim, depth_model, input_width)
    # blocks['F2'] : output_width = input_width (input is z_t, width=input_width)
    f2 = make_block_params(kf2, input_width, depth_model, input_width)
    # blocks['B1'] : output_width = 2*input_width + input_merge_width
    b1 = make_block_params(kb1, 2 * input_width, depth_model,
                           2 * input_width + input_merge_width)

    params = (f1, f2, b1)

    latent, pred = two_forward_one_back(x_t, params, batch_tile=1024)
    latent = jax.block_until_ready(latent)
    pred = jax.block_until_ready(pred)

    ref_latent, ref_pred = pure_jax_reference(x_t, params)
    assert latent.shape == (batch, 2 * input_width)
    assert pred.shape == (batch, 2 * input_width + input_merge_width)
    assert jnp.allclose(latent, ref_latent, atol=1e-3, rtol=1e-3)
    assert jnp.allclose(pred, ref_pred, atol=1e-3, rtol=1e-3)

    print("KERNEL_OK")
</pallas_src>

<mosaic_0001>
module attributes {stable_mosaic.version = 11 : i64} {
  func.func @kernel(%arg0: i32, %arg1: memref<16x256xf32, #tpu.memory_space<vmem>>, %arg2: memref<96x16xf32, #tpu.memory_space<vmem>>, %arg3: memref<32x32xf32, #tpu.memory_space<vmem>>, %arg4: memref<128x1xf32, #tpu.memory_space<vmem>>, %arg5: memref<32x256xf32, #tpu.memory_space<vmem>>) attributes {dimension_semantics = [#tpu.dimension_semantics<parallel>], iteration_bounds = array<i64: 1>, scalar_prefetch = 0 : i64, scratch_operands = 0 : i64, tpu.core_type = #tpu.core_type<tc>, window_params = [{transform_indices = @transform_0, window_bounds = array<i64: 16, 256>}, {pipeline_mode = #tpu.pipeline_mode<synchronous>, transform_indices = @transform_1, window_bounds = array<i64: 96, 16>}, {pipeline_mode = #tpu.pipeline_mode<synchronous>, transform_indices = @transform_2, window_bounds = array<i64: 32, 32>}, {pipeline_mode = #tpu.pipeline_mode<synchronous>, transform_indices = @transform_3, window_bounds = array<i64: 128, 1>}, {transform_indices = @transform_4, window_bounds = array<i64: 32, 256>}]} {
    %c0 = arith.constant 0 : index
    %c0_0 = arith.constant 0 : index
    %0 = vector.load %arg1[%c0, %c0_0] : memref<16x256xf32, #tpu.memory_space<vmem>>, vector<16x256xf32>
    %1 = arith.truncf %0 : vector<16x256xf32> to vector<16x256xbf16>
    %c0_1 = arith.constant 0 : index
    %c0_2 = arith.constant 0 : index
    %2 = vector.load %arg2[%c0_1, %c0_2] : memref<96x16xf32, #tpu.memory_space<vmem>>, vector<32x16xf32>
    %3 = arith.truncf %2 : vector<32x16xf32> to vector<32x16xbf16>
    %cst = arith.constant dense<0.000000e+00> : vector<32x256xf32>
    %4 = tpu.matmul %3, %1, %cst {dimension_numbers = #tpu.dot_dimension_numbers<[1], [0], [0], [1], [0, 0, 1, 1], [], []>} : vector<32x16xbf16>, vector<16x256xbf16>, vector<32x256xf32> -> vector<32x256xf32>
    %c0_3 = arith.constant 0 : index
    %c0_4 = arith.constant 0 : index
    %5 = vector.load %arg4[%c0_3, %c0_4] : memref<128x1xf32, #tpu.memory_space<vmem>>, vector<32x1xf32>
    %6 = vector.broadcast %5 : vector<32x1xf32> to vector<32x256xf32>
    %7 = arith.addf %4, %6 : vector<32x256xf32>
    %cst_5 = arith.constant 5.000000e-01 : f32
    %8 = vector.broadcast %cst_5 : f32 to vector<32x256xf32>
    %9 = arith.mulf %8, %7 : vector<32x256xf32>
    %cst_6 = arith.constant 4.471500e-02 : f32
    %10 = vector.broadcast %cst_6 : f32 to vector<32x256xf32>
    %11 = arith.mulf %10, %7 : vector<32x256xf32>
    %12 = arith.mulf %11, %7 : vector<32x256xf32>
    %13 = arith.mulf %12, %7 : vector<32x256xf32>
    %14 = arith.addf %7, %13 : vector<32x256xf32>
    %cst_7 = arith.constant 0.797884583 : f32
    %15 = vector.broadcast %cst_7 : f32 to vector<32x256xf32>
    %16 = arith.mulf %15, %14 : vector<32x256xf32>
    %17 = math.tanh %16 : vector<32x256xf32>
    %cst_8 = arith.constant 1.000000e+00 : f32
    %18 = vector.broadcast %cst_8 : f32 to vector<32x256xf32>
    %19 = arith.addf %18, %17 : vector<32x256xf32>
    %20 = arith.mulf %9, %19 : vector<32x256xf32>
    %c0_9 = arith.constant 0 : index
    %c0_10 = arith.constant 0 : index
    %21 = vector.load %arg3[%c0_9, %c0_10] : memref<32x32xf32, #tpu.memory_space<vmem>>, vector<8x32xf32>
    %22 = arith.truncf %21 : vector<8x32xf32> to vector<8x32xbf16>
    %23 = arith.truncf %20 : vector<32x256xf32> to vector<32x256xbf16>
    %cst_11 = arith.constant dense<0.000000e+00> : vector<8x256xf32>
    %24 = tpu.matmul %22, %23, %cst_11 {dimension_numbers = #tpu.dot_dimension_numbers<[1], [0], [0], [1], [0, 0, 1, 1], [], []>} : vector<8x32xbf16>, vector<32x256xbf16>, vector<8x256xf32> -> vector<8x256xf32>
    %c96 = arith.constant 96 : index
    %c0_12 = arith.constant 0 : index
    %25 = vector.load %arg4[%c96, %c0_12] : memref<128x1xf32, #tpu.memory_space<vmem>>, vector<8x1xf32>
    %26 = vector.broadcast %25 : vector<8x1xf32> to vector<8x256xf32>
    %27 = arith.addf %24, %26 : vector<8x256xf32>
    %c32 = arith.constant 32 : index
    %c0_13 = arith.constant 0 : index
    %28 = vector.load %arg2[%c32, %c0_13] : memref<96x16xf32, #tpu.memory_space<vmem>>, vector<32x8xf32>
    %29 = arith.truncf %28 : vector<32x8xf32> to vector<32x8xbf16>
    %30 = arith.truncf %27 : vector<8x256xf32> to vector<8x256xbf16>
    %cst_14 = arith.constant dense<0.000000e+00> : vector<32x256xf32>
    %31 = tpu.matmul %29, %30, %cst_14 {dimension_numbers = #tpu.dot_dimension_numbers<[1], [0], [0], [1], [0, 0, 1, 1], [], []>} : vector<32x8xbf16>, vector<8x256xbf16>, vector<32x256xf32> -> vector<32x256xf32>
    %c32_15 = arith.constant 32 : index
    %c0_16 = arith.constant 0 : index
    %32 = vector.load %arg4[%c32_15, %c0_16] : memref<128x1xf32, #tpu.memory_space<vmem>>, vector<32x1xf32>
    %33 = vector.broadcast %32 : vector<32x1xf32> to vector<32x256xf32>
    %34 = arith.addf %31, %33 : vector<32x256xf32>
    %cst_17 = arith.constant 5.000000e-01 : f32
    %35 = vector.broadcast %cst_17 : f32 to vector<32x256xf32>
    %36 = arith.mulf %35, %34 : vector<32x256xf32>
    %cst_18 = arith.constant 4.471500e-02 : f32
    %37 = vector.broadcast %cst_18 : f32 to vector<32x256xf32>
    %38 = arith.mulf %37, %34 : vector<32x256xf32>
    %39 = arith.mulf %38, %34 : vector<32x256xf32>
    %40 = arith.mulf %39, %34 : vector<32x256xf32>
    %41 = arith.addf %34, %40 : vector<32x256xf32>
    %cst_19 = arith.constant 0.797884583 : f32
    %42 = vector.broadcast %cst_19 : f32 to vector<32x256xf32>
    %43 = arith.mulf %42, %41 : vector<32x256xf32>
    %44 = math.tanh %43 : vector<32x256xf32>
    %cst_20 = arith.constant 1.000000e+00 : f32
    %45 = vector.broadcast %cst_20 : f32 to vector<32x256xf32>
    %46 = arith.addf %45, %44 : vector<32x256xf32>
    %47 = arith.mulf %36, %46 : vector<32x256xf32>
    %c8 = arith.constant 8 : index
    %c0_21 = arith.constant 0 : index
    %48 = vector.load %arg3[%c8, %c0_21] : memref<32x32xf32, #tpu.memory_space<vmem>>, vector<8x32xf32>
    %49 = arith.truncf %48 : vector<8x32xf32> to vector<8x32xbf16>
    %50 = arith.truncf %47 : vector<32x256xf32> to vector<32x256xbf16>
    %cst_22 = arith.constant dense<0.000000e+00> : vector<8x256xf32>
    %51 = tpu.matmul %49, %50, %cst_22 {dimension_numbers = #tpu.dot_dimension_numbers<[1], [0], [0], [1], [0, 0, 1, 1], [], []>} : vector<8x32xbf16>, vector<32x256xbf16>, vector<8x256xf32> -> vector<8x256xf32>
    %c104 = arith.constant 104 : index
    %c0_23 = arith.constant 0 : index
    %52 = vector.load %arg4[%c104, %c0_23] : memref<128x1xf32, #tpu.memory_space<vmem>>, vector<8x1xf32>
    %53 = vector.broadcast %52 : vector<8x1xf32> to vector<8x256xf32>
    %54 = arith.addf %51, %53 : vector<8x256xf32>
    %55 = tpu.concatenate %27, %54 in 0 : vector<8x256xf32>, vector<8x256xf32> -> vector<16x256xf32>
    %c64 = arith.constant 64 : index
    %c0_24 = arith.constant 0 : index
    %56 = vector.load %arg2[%c64, %c0_24] : memref<96x16xf32, #tpu.memory_space<vmem>>, vector<32x16xf32>
    %57 = arith.truncf %56 : vector<32x16xf32> to vector<32x16xbf16>
    %58 = arith.truncf %55 : vector<16x256xf32> to vector<16x256xbf16>
    %cst_25 = arith.constant dense<0.000000e+00> : vector<32x256xf32>
    %59 = tpu.matmul %57, %58, %cst_25 {dimension_numbers = #tpu.dot_dimension_numbers<[1], [0], [0], [1], [0, 0, 1, 1], [], []>} : vector<32x16xbf16>, vector<16x256xbf16>, vector<32x256xf32> -> vector<32x256xf32>
    %c64_26 = arith.constant 64 : index
    %c0_27 = arith.constant 0 : index
    %60 = vector.load %arg4[%c64_26, %c0_27] : memref<128x1xf32, #tpu.memory_space<vmem>>, vector<32x1xf32>
    %61 = vector.broadcast %60 : vector<32x1xf32> to vector<32x256xf32>
    %62 = arith.addf %59, %61 : vector<32x256xf32>
    %cst_28 = arith.constant 5.000000e-01 : f32
    %63 = vector.broadcast %cst_28 : f32 to vector<32x256xf32>
    %64 = arith.mulf %63, %62 : vector<32x256xf32>
    %cst_29 = arith.constant 4.471500e-02 : f32
    %65 = vector.broadcast %cst_29 : f32 to vector<32x256xf32>
    %66 = arith.mulf %65, %62 : vector<32x256xf32>
    %67 = arith.mulf %66, %62 : vector<32x256xf32>
    %68 = arith.mulf %67, %62 : vector<32x256xf32>
    %69 = arith.addf %62, %68 : vector<32x256xf32>
    %cst_30 = arith.constant 0.797884583 : f32
    %70 = vector.broadcast %cst_30 : f32 to vector<32x256xf32>
    %71 = arith.mulf %70, %69 : vector<32x256xf32>
    %72 = math.tanh %71 : vector<32x256xf32>
    %cst_31 = arith.constant 1.000000e+00 : f32
    %73 = vector.broadcast %cst_31 : f32 to vector<32x256xf32>
    %74 = arith.addf %73, %72 : vector<32x256xf32>
    %75 = arith.mulf %64, %74 : vector<32x256xf32>
    %c16 = arith.constant 16 : index
    %c0_32 = arith.constant 0 : index
    %76 = vector.load %arg3[%c16, %c0_32] : memref<32x32xf32, #tpu.memory_space<vmem>>, vector<16x32xf32>
    %77 = arith.truncf %76 : vector<16x32xf32> to vector<16x32xbf16>
    %78 = arith.truncf %75 : vector<32x256xf32> to vector<32x256xbf16>
    %cst_33 = arith.constant dense<0.000000e+00> : vector<16x256xf32>
    %79 = tpu.matmul %77, %78, %cst_33 {dimension_numbers = #tpu.dot_dimension_numbers<[1], [0], [0], [1], [0, 0, 1, 1], [], []>} : vector<16x32xbf16>, vector<32x256xbf16>, vector<16x256xf32> -> vector<16x256xf32>
    %c112 = arith.constant 112 : index
    %c0_34 = arith.constant 0 : index
    %80 = vector.load %arg4[%c112, %c0_34] : memref<128x1xf32, #tpu.memory_space<vmem>>, vector<16x1xf32>
    %81 = vector.broadcast %80 : vector<16x1xf32> to vector<16x256xf32>
    %82 = arith.addf %79, %81 : vector<16x256xf32>
    %83 = tpu.concatenate %55, %82 in 0 : vector<16x256xf32>, vector<16x256xf32> -> vector<32x256xf32>
    %c0_35 = arith.constant 0 : index
    %c0_36 = arith.constant 0 : index
    %84 = vector.load %arg5[%c0_35, %c0_36] : memref<32x256xf32, #tpu.memory_space<vmem>>, vector<32x256xf32>
    tpu.vector_store %arg5[%c0_35, %c0_36], %83 {strides = array<i32>} : memref<32x256xf32, #tpu.memory_space<vmem>>, vector<32x256xf32>,
    return
  }
  func.func @transform_0(%arg0: i32) -> (i32, i32) {
    %c0_i32 = arith.constant 0 : i32
    %c0_i32_0 = arith.constant 0 : i32
    return %c0_i32, %arg0 : i32, i32
  }
  func.func @transform_1(%arg0: i32) -> (i32, i32) {
    %c0_i32 = arith.constant 0 : i32
    %c0_i32_0 = arith.constant 0 : i32
    %c0_i32_1 = arith.constant 0 : i32
    return %c0_i32, %c0_i32_0 : i32, i32
  }
  func.func @transform_2(%arg0: i32) -> (i32, i32) {
    %c0_i32 = arith.constant 0 : i32
    %c0_i32_0 = arith.constant 0 : i32
    %c0_i32_1 = arith.constant 0 : i32
    return %c0_i32, %c0_i32_0 : i32, i32
  }
  func.func @transform_3(%arg0: i32) -> (i32, i32) {
    %c0_i32 = arith.constant 0 : i32
    %c0_i32_0 = arith.constant 0 : i32
    %c0_i32_1 = arith.constant 0 : i32
    return %c0_i32, %c0_i32_0 : i32, i32
  }
  func.func @transform_4(%arg0: i32) -> (i32, i32) {
    %c0_i32 = arith.constant 0 : i32
    %c0_i32_0 = arith.constant 0 : i32
    return %c0_i32, %arg0 : i32, i32
  }
}

</mosaic_0001>

<llo_original>
// kernel: tpu_custom_call.1
$region0: #{tpu_custom_call.1}
  #allocation0 [shape = 'u32[]', space=smem, size = 0x4, offset = 0x4, fixed_abs, tag = 'smem constant byte address 0x4 - core index']
  #allocation1 [shape = 'u32[144,128]{1,0:T(1,128)}', space=vmem, size = 0x12000, scoped, tag = 'internal scratch']
  %s0 = inlined_call_operand.vmem [shape: f32[16,256], index: 0, kind: input, shape index: {}]
  %s1 = inlined_call_operand.vmem [shape: f32[96,16], index: 1, kind: input, shape index: {}]
  %s2 = inlined_call_operand.vmem [shape: f32[32,32], index: 2, kind: input, shape index: {}]
  %s3 = inlined_call_operand.vmem [shape: f32[128,1], index: 3, kind: input, shape index: {}]
  %s4 = inlined_call_operand.hbm [shape: f32[32,256], index: 4, kind: output, shape index: {}]
  %s5 = sld [smem:[#allocation0]]
  $region26: #{tpu_custom_call.1} parent=0
    _
  %s7 = ssub.s32 1, %s5
  %s8 = scalar_select 0, %s7, %s5
  $region1: #{tpu_custom_call.1} parent=0
    #allocation2 [shape = 'u8[32768]{0}', space=vmem, size = 0x8000, scoped, tag = 'output window, operand 0, single buffered']
    #allocation3 [shape = 's32[1]{0}', space=sflag, size = 0x4, scoped, tag = 'scoped memory for tpu_custom_call.1']
    %9 = vsyncpa [#allocation3], 0
    // Predicated region
    $region2: #{tpu_custom_call.1} parent=1 // pred_check
      _
    $region3: #{tpu_custom_call.1} parent=1 // pred_check_branch
      %11 = sbr.rel (0) target = $region5
    $region4: #{tpu_custom_call.1} parent=1 // pred_region
      _
    $region5: #{tpu_custom_call.1} parent=1 // pred_fallthru
      _
    // Predicated region
    $region6: #{tpu_custom_call.1} parent=1 // pred_check
      _
    $region7: #{tpu_custom_call.1} parent=1 // pred_check_branch
      %13 = sbr.rel (0) target = $region9
    $region8: #{tpu_custom_call.1} parent=1 // pred_region
      _
    $region9: #{tpu_custom_call.1} parent=1 // pred_fallthru
      _
    // Predicated region
    $region10: #{tpu_custom_call.1} parent=1 // pred_check
      _
    $region11: #{tpu_custom_call.1} parent=1 // pred_check_branch
      %15 = sbr.rel (0) target = $region13
    $region12: #{tpu_custom_call.1} parent=1 // pred_region
      _
    $region13: #{tpu_custom_call.1} parent=1 // pred_fallthru
      _
    // Predicated region
    $region14: #{tpu_custom_call.1} parent=1 // pred_check
      _
    $region15: #{tpu_custom_call.1} parent=1 // pred_check_branch
      %17 = sbr.rel (0) target = $region17
    $region16: #{tpu_custom_call.1} parent=1 // pred_region
      _
    $region17: #{tpu_custom_call.1} parent=1 // pred_fallthru
      _
    %v19 = vld [vmem:[%s0] sm:$0xff]
    %v20 = vld [vmem:[%s0 + $0x8] sm:$0xff]
    %v21 = vld [vmem:[%s0 + $0x10] sm:$0xff]
    %v22 = vld [vmem:[%s0 + $0x18] sm:$0xff]
    %v23 = vpack.c.bf16 %v21, %v19
    %v24 = vpack.c.bf16 %v22, %v20
    %v25 = vld [vmem:[%s1] sm:$0xff]
    %v26 = vld [vmem:[%s1 + $0x8] sm:$0xff]
    %v27 = vld [vmem:[%s1 + $0x10] sm:$0xff]
    %v28 = vld [vmem:[%s1 + $0x18] sm:$0xff]
    %v29 = vpack.c.bf16 %v26, %v25
    %v30 = vpack.c.bf16 %v28, %v27
    %v31 = vld [vmem:[%s3] sm:$0xff]
    %v32 = vld [vmem:[%s3 + $0x8] sm:$0xff]
    %v33 = vld [vmem:[%s3 + $0x10] sm:$0xff]
    %v34 = vld [vmem:[%s3 + $0x18] sm:$0xff]
    %36 = vset.pattern.permute.xlu0 0
    %37 = vperm.xlu0 %36, %v31
    %v38 = vpop.permute.xlu0 %37
    %41 = vset.pattern.permute.xlu0 0
    %42 = vperm.xlu0 %41, %v32
    %v43 = vpop.permute.xlu0 %42
    %46 = vset.pattern.permute.xlu0 0
    %47 = vperm.xlu0 %46, %v33
    %v48 = vpop.permute.xlu0 %47
    %51 = vset.pattern.permute.xlu0 0
    %52 = vperm.xlu0 %51, %v34
    %v53 = vpop.permute.xlu0 %52
    %vm55 = vcmask 130048
    %v57 = vsel %vm55, %v29, 0
    %v60 = vsel %vm55, %v30, 0
    %62 = vmatprep.subr.bf16.mxu0 0
    %63 = vmatpush1.bf16.msra.mxu0 0
    %64 = vmatprep.subr.bf16.mxu0 0
    %65 = vmatpush1.bf16.msra.mxu0 0
    %66 = vmatprep.subr.bf16.mxu0 0
    %67 = vmatpush1.bf16.msra.mxu0 0
    %68 = vmatprep.subr.bf16.mxu0 0
    %69 = vmatpush1.bf16.msra.mxu0 0
    %70 = vmatprep.subr.bf16.mxu0 0
    %71 = vmatpush1.bf16.msra.mxu0 0
    %72 = vmatprep.subr.bf16.mxu0 0
    %73 = vmatpush1.bf16.msra.mxu0 0
    %74 = vmatprep.subr.bf16.mxu0 0
    %75 = vmatpush1.bf16.msra.mxu0 0
    %76 = vmatprep.subr.bf16.mxu0 %v24
    %77 = vmatpush1.bf16.msra.mxu0 %v23
    %78 = vmatprep.subr.bf16.mxu0 0
    %79 = vmatpush2.bf16.msra.mxu0 0
    %80 = vmatprep.subr.bf16.mxu0 0
    %81 = vmatpush2.bf16.msra.mxu0 0
    %82 = vmatprep.subr.bf16.mxu0 0
    %83 = vmatpush2.bf16.msra.mxu0 0
    %84 = vmatprep.subr.bf16.mxu0 0
    %85 = vmatpush2.bf16.msra.mxu0 0
    %86 = vmatprep.subr.bf16.mxu0 0
    %87 = vmatpush2.bf16.msra.mxu0 0
    %88 = vmatprep.subr.bf16.mxu0 0
    %89 = vmatpush2.bf16.msra.mxu0 0
    %90 = vmatprep.subr.bf16.mxu0 0
    %91 = vmatpush2.bf16.msra.mxu0 0
    %92 = vmatprep.subr.bf16.mxu0 0
    %93 = vmatpush2.bf16.msra.mxu0 0
    %94 = vmatprep.mubr.bf16.mxu0 0
    %95 = vmatmul.mubr.bf16.gmra.mxu0 %v57
    %v96 = vpop.f32.mrf.mxu0
    %v97 = vadd.f32 %v38, %v96
    %v98 = vpop.f32.mrf.mxu0
    %v99 = vadd.f32 %v38, %v98
    %v100 = vpop.f32.mrf.mxu0
    %v101 = vadd.f32 %v43, %v100
    %v102 = vpop.f32.mrf.mxu0
    %v103 = vadd.f32 %v43, %v102
    %104 = vmatprep.mubr.bf16.mxu0 0
    %105 = vmatmul.mubr.bf16.gmra.mxu0 %v60
    %v106 = vpop.f32.mrf.mxu0
    %v107 = vadd.f32 %v48, %v106
    %v108 = vpop.f32.mrf.mxu0
    %v109 = vadd.f32 %v48, %v108
    %v110 = vpop.f32.mrf.mxu0
    %v111 = vadd.f32 %v53, %v110
    %v112 = vpop.f32.mrf.mxu0
    %v113 = vadd.f32 %v53, %v112
    %114 = vdwg.mxu0
    %v115 = vmul.f32 %v97, 0.5
    %v116 = vmul.f32 %v99, 0.5
    %v117 = vmul.f32 %v101, 0.5
    %v118 = vmul.f32 %v103, 0.5
    %v119 = vmul.f32 %v107, 0.5
    %v120 = vmul.f32 %v109, 0.5
    %v121 = vmul.f32 %v111, 0.5
    %v122 = vmul.f32 %v113, 0.5
    %v123 = vmul.f32 %v97, 0.044715
    %v124 = vmul.f32 %v99, 0.044715
    %v125 = vmul.f32 %v101, 0.044715
    %v126 = vmul.f32 %v103, 0.044715
    %v127 = vmul.f32 %v107, 0.044715
    %v128 = vmul.f32 %v109, 0.044715
    %v129 = vmul.f32 %v111, 0.044715
    %v130 = vmul.f32 %v113, 0.044715
    %v131 = vmul.f32 %v123, %v97
    %v132 = vmul.f32 %v124, %v99
    %v133 = vmul.f32 %v125, %v101
    %v134 = vmul.f32 %v126, %v103
    %v135 = vmul.f32 %v127, %v107
    %v136 = vmul.f32 %v128, %v109
    %v137 = vmul.f32 %v129, %v111
    %v138 = vmul.f32 %v130, %v113
    %v139 = vmul.f32 %v131, %v97
    %v140 = vmul.f32 %v132, %v99
    %v141 = vmul.f32 %v133, %v101
    %v142 = vmul.f32 %v134, %v103
    %v143 = vmul.f32 %v135, %v107
    %v144 = vmul.f32 %v136, %v109
    %v145 = vmul.f32 %v137, %v111
    %v146 = vmul.f32 %v138, %v113
    %v147 = vadd.f32 %v97, %v139
    %v148 = vadd.f32 %v99, %v140
    %v149 = vadd.f32 %v101, %v141
    %v150 = vadd.f32 %v103, %v142
    %v151 = vadd.f32 %v107, %v143
    %v152 = vadd.f32 %v109, %v144
    %v153 = vadd.f32 %v111, %v145
    %v154 = vadd.f32 %v113, %v146
    %v155 = vmul.f32 %v147, 0.7978846
    %v156 = vmul.f32 %v148, 0.7978846
    %v157 = vmul.f32 %v149, 0.7978846
    %v158 = vmul.f32 %v150, 0.7978846
    %v159 = vmul.f32 %v151, 0.7978846
    %v160 = vmul.f32 %v152, 0.7978846
    %v161 = vmul.f32 %v153, 0.7978846
    %v162 = vmul.f32 %v154, 0.7978846
    %v163 = vtanh.pop %v155
    %v164 = vtanh.pop %v156
    %v165 = vtanh.pop %v157
    %v166 = vtanh.pop %v158
    %v167 = vtanh.pop %v159
    %v168 = vtanh.pop %v160
    %v169 = vtanh.pop %v161
    %v170 = vtanh.pop %v162
    %v171 = vadd.f32 %v163, 1.0
    %v172 = vadd.f32 %v164, 1.0
    %v173 = vadd.f32 %v165, 1.0
    %v174 = vadd.f32 %v166, 1.0
    %v175 = vadd.f32 %v167, 1.0
    %v176 = vadd.f32 %v168, 1.0
    %v177 = vadd.f32 %v169, 1.0
    %v178 = vadd.f32 %v170, 1.0
    %v179 = vmul.f32 %v115, %v171
    %v180 = vmul.f32 %v116, %v172
    %v181 = vmul.f32 %v117, %v173
    %v182 = vmul.f32 %v118, %v174
    %v183 = vmul.f32 %v119, %v175
    %v184 = vmul.f32 %v120, %v176
    %v185 = vmul.f32 %v121, %v177
    %v186 = vmul.f32 %v122, %v178
    %v187 = vld [vmem:[%s2] sm:$0xff]
    %v188 = vpack.c.bf16 %v187, %v187
    %v189 = vpack.c.bf16 %v181, %v179
    %v190 = vpack.c.bf16 %v182, %v180
    %v191 = vpack.c.bf16 %v185, %v183
    %v192 = vpack.c.bf16 %v186, %v184
    %v193 = vld [vmem:[%s3 + $0x60] sm:$0xff]
    %195 = vset.pattern.permute.xlu0 0
    %196 = vperm.xlu0 %195, %v193
    %v197 = vpop.permute.xlu0 %196
    %vm199 = vcmask 261120
    %v201 = vsel %vm199, %v188, 0
    %203 = vmatprep.subr.bf16.mxu0 0
    %204 = vmatpush1.bf16.msra.mxu0 0
    %205 = vmatprep.subr.bf16.mxu0 0
    %206 = vmatpush1.bf16.msra.mxu0 0
    %207 = vmatprep.subr.bf16.mxu0 0
    %208 = vmatpush1.bf16.msra.mxu0 0
    %209 = vmatprep.subr.bf16.mxu0 0
    %210 = vmatpush1.bf16.msra.mxu0 0
    %211 = vmatprep.subr.bf16.mxu0 0
    %212 = vmatpush1.bf16.msra.mxu0 0
    %213 = vmatprep.subr.bf16.mxu0 0
    %214 = vmatpush1.bf16.msra.mxu0 0
    %215 = vmatprep.subr.bf16.mxu0 %v192
    %216 = vmatpush1.bf16.msra.mxu0 %v191
    %217 = vmatprep.subr.bf16.mxu0 %v190
    %218 = vmatpush1.bf16.msra.mxu0 %v189
    %219 = vmatprep.subr.bf16.mxu0 0
    %220 = vmatpush2.bf16.msra.mxu0 0
    %221 = vmatprep.subr.bf16.mxu0 0
    %222 = vmatpush2.bf16.msra.mxu0 0
    %223 = vmatprep.subr.bf16.mxu0 0
    %224 = vmatpush2.bf16.msra.mxu0 0
    %225 = vmatprep.subr.bf16.mxu0 0
    %226 = vmatpush2.bf16.msra.mxu0 0
    %227 = vmatprep.subr.bf16.mxu0 0
    %228 = vmatpush2.bf16.msra.mxu0 0
    %229 = vmatprep.subr.bf16.mxu0 0
    %230 = vmatpush2.bf16.msra.mxu0 0
    %231 = vmatprep.subr.bf16.mxu0 0
    %232 = vmatpush2.bf16.msra.mxu0 0
    %233 = vmatprep.subr.bf16.mxu0 0
    %234 = vmatpush2.bf16.msra.mxu0 0
    %235 = vmatprep.mubr.bf16.mxu0 0
    %236 = vmatmul.mubr.bf16.gmra.mxu0 %v201
    %v237 = vpop.f32.mrf.mxu0
    %v238 = vadd.f32 %v197, %v237
    %v239 = vpop.f32.mrf.mxu0
    %v240 = vadd.f32 %v197, %v239
    %v241 = vpop.f32.mrf.mxu0
    %v242 = vpop.f32.mrf.mxu0
    %243 = vdwg.mxu0
    %v244 = vld [vmem:[%s1 + $0x20] sm:$0xff]
    %v245 = vld [vmem:[%s1 + $0x28] sm:$0xff]
    %v246 = vld [vmem:[%s1 + $0x30] sm:$0xff]
    %v247 = vld [vmem:[%s1 + $0x38] sm:$0xff]
    %v248 = vpack.c.bf16 %v245, %v244
    %v249 = vpack.c.bf16 %v247, %v246
    %v250 = vpack.c.bf16 %v238, %v238
    %v251 = vpack.c.bf16 %v240, %v240
    %v252 = vld [vmem:[%s3 + $0x20] sm:$0xff]
    %v253 = vld [vmem:[%s3 + $0x28] sm:$0xff]
    %v254 = vld [vmem:[%s3 + $0x30] sm:$0xff]
    %v255 = vld [vmem:[%s3 + $0x38] sm:$0xff]
    %257 = vset.pattern.permute.xlu0 0
    %258 = vperm.xlu0 %257, %v252
    %v259 = vpop.permute.xlu0 %258
    %262 = vset.pattern.permute.xlu0 0
    %263 = vperm.xlu0 %262, %v253
    %v264 = vpop.permute.xlu0 %263
    %267 = vset.pattern.permute.xlu0 0
    %268 = vperm.xlu0 %267, %v254
    %v269 = vpop.permute.xlu0 %268
    %272 = vset.pattern.permute.xlu0 0
    %273 = vperm.xlu0 %272, %v255
    %v274 = vpop.permute.xlu0 %273
    %vm276 = vcmask 64512
    %v278 = vsel %vm276, %v248, 0
    %v281 = vsel %vm276, %v249, 0
    %vm283 = vcmask 1043456
    %v285 = vsel %vm283, %v250, 0
    %v288 = vsel %vm283, %v251, 0
    %290 = vmatprep.subr.bf16.mxu0 0
    %291 = vmatpush1.bf16.msra.mxu0 0
    %292 = vmatprep.subr.bf16.mxu0 0
    %293 = vmatpush1.bf16.msra.mxu0 0
    %294 = vmatprep.subr.bf16.mxu0 0
    %295 = vmatpush1.bf16.msra.mxu0 0
    %296 = vmatprep.subr.bf16.mxu0 0
    %297 = vmatpush1.bf16.msra.mxu0 0
    %298 = vmatprep.subr.bf16.mxu0 0
    %299 = vmatpush1.bf16.msra.mxu0 0
    %300 = vmatprep.subr.bf16.mxu0 0
    %301 = vmatpush1.bf16.msra.mxu0 0
    %302 = vmatprep.subr.bf16.mxu0 0
    %303 = vmatpush1.bf16.msra.mxu0 0
    %304 = vmatprep.subr.bf16.mxu0 %v288
    %305 = vmatpush1.bf16.msra.mxu0 %v285
    %306 = vmatprep.subr.bf16.mxu0 0
    %307 = vmatpush2.bf16.msra.mxu0 0
    %308 = vmatprep.subr.bf16.mxu0 0
    %309 = vmatpush2.bf16.msra.mxu0 0
    %310 = vmatprep.subr.bf16.mxu0 0
    %311 = vmatpush2.bf16.msra.mxu0 0
    %312 = vmatprep.subr.bf16.mxu0 0
    %313 = vmatpush2.bf16.msra.mxu0 0
    %314 = vmatprep.subr.bf16.mxu0 0
    %315 = vmatpush2.bf16.msra.mxu0 0
    %316 = vmatprep.subr.bf16.mxu0 0
    %317 = vmatpush2.bf16.msra.mxu0 0
    %318 = vmatprep.subr.bf16.mxu0 0
    %319 = vmatpush2.bf16.msra.mxu0 0
    %320 = vmatprep.subr.bf16.mxu0 0
    %321 = vmatpush2.bf16.msra.mxu0 0
    %322 = vmatprep.mubr.bf16.mxu0 0
    %323 = vmatmul.mubr.bf16.gmra.mxu0 %v278
    %v324 = vpop.f32.mrf.mxu0
    %v325 = vadd.f32 %v259, %v324
    %v326 = vpop.f32.mrf.mxu0
    %v327 = vadd.f32 %v259, %v326
    %v328 = vpop.f32.mrf.mxu0
    %v329 = vadd.f32 %v264, %v328
    %v330 = vpop.f32.mrf.mxu0
    %v331 = vadd.f32 %v264, %v330
    %332 = vmatprep.mubr.bf16.mxu0 0
    %333 = vmatmul.mubr.bf16.gmra.mxu0 %v281
    %v334 = vpop.f32.mrf.mxu0
    %v335 = vadd.f32 %v269, %v334
    %v336 = vpop.f32.mrf.mxu0
    %v337 = vadd.f32 %v269, %v336
    %v338 = vpop.f32.mrf.mxu0
    %v339 = vadd.f32 %v274, %v338
    %v340 = vpop.f32.mrf.mxu0
    %v341 = vadd.f32 %v274, %v340
    %342 = vdwg.mxu0
    %v343 = vmul.f32 %v325, 0.5
    %v344 = vmul.f32 %v327, 0.5
    %v345 = vmul.f32 %v329, 0.5
    %v346 = vmul.f32 %v331, 0.5
    %v347 = vmul.f32 %v335, 0.5
    %v348 = vmul.f32 %v337, 0.5
    %v349 = vmul.f32 %v339, 0.5
    %v350 = vmul.f32 %v341, 0.5
    %v351 = vmul.f32 %v325, 0.044715
    %v352 = vmul.f32 %v327, 0.044715
    %v353 = vmul.f32 %v329, 0.044715
    %v354 = vmul.f32 %v331, 0.044715
    %v355 = vmul.f32 %v335, 0.044715
    %v356 = vmul.f32 %v337, 0.044715
    %v357 = vmul.f32 %v339, 0.044715
    %v358 = vmul.f32 %v341, 0.044715
    %v359 = vmul.f32 %v351, %v325
    %v360 = vmul.f32 %v352, %v327
    %v361 = vmul.f32 %v353, %v329
    %v362 = vmul.f32 %v354, %v331
    %v363 = vmul.f32 %v355, %v335
    %v364 = vmul.f32 %v356, %v337
    %v365 = vmul.f32 %v357, %v339
    %v366 = vmul.f32 %v358, %v341
    %v367 = vmul.f32 %v359, %v325
    %v368 = vmul.f32 %v360, %v327
    %v369 = vmul.f32 %v361, %v329
    %v370 = vmul.f32 %v362, %v331
    %v371 = vmul.f32 %v363, %v335
    %v372 = vmul.f32 %v364, %v337
    %v373 = vmul.f32 %v365, %v339
    %v374 = vmul.f32 %v366, %v341
    %v375 = vadd.f32 %v325, %v367
    %v376 = vadd.f32 %v327, %v368
    %v377 = vadd.f32 %v329, %v369
    %v378 = vadd.f32 %v331, %v370
    %v379 = vadd.f32 %v335, %v371
    %v380 = vadd.f32 %v337, %v372
    %v381 = vadd.f32 %v339, %v373
    %v382 = vadd.f32 %v341, %v374
    %v383 = vmul.f32 %v375, 0.7978846
    %v384 = vmul.f32 %v376, 0.7978846
    %v385 = vmul.f32 %v377, 0.7978846
    %v386 = vmul.f32 %v378, 0.7978846
    %v387 = vmul.f32 %v379, 0.7978846
    %v388 = vmul.f32 %v380, 0.7978846
    %v389 = vmul.f32 %v381, 0.7978846
    %v390 = vmul.f32 %v382, 0.7978846
    %v391 = vtanh.pop %v383
    %v392 = vtanh.pop %v384
    %v393 = vtanh.pop %v385
    %v394 = vtanh.pop %v386
    %v395 = vtanh.pop %v387
    %v396 = vtanh.pop %v388
    %v397 = vtanh.pop %v389
    %v398 = vtanh.pop %v390
    %v399 = vadd.f32 %v391, 1.0
    %v400 = vadd.f32 %v392, 1.0
    %v401 = vadd.f32 %v393, 1.0
    %v402 = vadd.f32 %v394, 1.0
    %v403 = vadd.f32 %v395, 1.0
    %v404 = vadd.f32 %v396, 1.0
    %v405 = vadd.f32 %v397, 1.0
    %v406 = vadd.f32 %v398, 1.0
    %v407 = vmul.f32 %v343, %v399
    %v408 = vmul.f32 %v344, %v400
    %v409 = vmul.f32 %v345, %v401
    %v410 = vmul.f32 %v346, %v402
    %v411 = vmul.f32 %v347, %v403
    %v412 = vmul.f32 %v348, %v404
    %v413 = vmul.f32 %v349, %v405
    %v414 = vmul.f32 %v350, %v406
    %v415 = vld [vmem:[%s2 + $0x8] sm:$0xff]
    %v416 = vpack.c.bf16 %v415, %v415
    %v417 = vpack.c.bf16 %v409, %v407
    %v418 = vpack.c.bf16 %v410, %v408
    %v419 = vpack.c.bf16 %v413, %v411
    %v420 = vpack.c.bf16 %v414, %v412
    %v421 = vld [vmem:[%s3 + $0x68] sm:$0xff]
    %423 = vset.pattern.permute.xlu0 0
    %424 = vperm.xlu0 %423, %v421
    %v425 = vpop.permute.xlu0 %424
    %v428 = vsel %vm199, %v416, 0
    %430 = vmatprep.subr.bf16.mxu0 0
    %431 = vmatpush1.bf16.msra.mxu0 0
    %432 = vmatprep.subr.bf16.mxu0 0
    %433 = vmatpush1.bf16.msra.mxu0 0
    %434 = vmatprep.subr.bf16.mxu0 0
    %435 = vmatpush1.bf16.msra.mxu0 0
    %436 = vmatprep.subr.bf16.mxu0 0
    %437 = vmatpush1.bf16.msra.mxu0 0
    %438 = vmatprep.subr.bf16.mxu0 0
    %439 = vmatpush1.bf16.msra.mxu0 0
    %440 = vmatprep.subr.bf16.mxu0 0
    %441 = vmatpush1.bf16.msra.mxu0 0
    %442 = vmatprep.subr.bf16.mxu0 %v420
    %443 = vmatpush1.bf16.msra.mxu0 %v419
    %444 = vmatprep.subr.bf16.mxu0 %v418
    %445 = vmatpush1.bf16.msra.mxu0 %v417
    %446 = vmatprep.subr.bf16.mxu0 0
    %447 = vmatpush2.bf16.msra.mxu0 0
    %448 = vmatprep.subr.bf16.mxu0 0
    %449 = vmatpush2.bf16.msra.mxu0 0
    %450 = vmatprep.subr.bf16.mxu0 0
    %451 = vmatpush2.bf16.msra.mxu0 0
    %452 = vmatprep.subr.bf16.mxu0 0
    %453 = vmatpush2.bf16.msra.mxu0 0
    %454 = vmatprep.subr.bf16.mxu0 0
    %455 = vmatpush2.bf16.msra.mxu0 0
    %456 = vmatprep.subr.bf16.mxu0 0
    %457 = vmatpush2.bf16.msra.mxu0 0
    %458 = vmatprep.subr.bf16.mxu0 0
    %459 = vmatpush2.bf16.msra.mxu0 0
    %460 = vmatprep.subr.bf16.mxu0 0
    %461 = vmatpush2.bf16.msra.mxu0 0
    %462 = vmatprep.mubr.bf16.mxu0 0
    %463 = vmatmul.mubr.bf16.gmra.mxu0 %v428
    %v464 = vpop.f32.mrf.mxu0
    %v465 = vadd.f32 %v425, %v464
    %v466 = vpop.f32.mrf.mxu0
    %v467 = vadd.f32 %v425, %v466
    %v468 = vpop.f32.mrf.mxu0
    %v469 = vpop.f32.mrf.mxu0
    %470 = vdwg.mxu0
    %v471 = vld [vmem:[%s1 + $0x40] sm:$0xff]
    %v472 = vld [vmem:[%s1 + $0x48] sm:$0xff]
    %v473 = vld [vmem:[%s1 + $0x50] sm:$0xff]
    %v474 = vld [vmem:[%s1 + $0x58] sm:$0xff]
    %v475 = vpack.c.bf16 %v472, %v471
    %v476 = vpack.c.bf16 %v474, %v473
    %v477 = vpack.c.bf16 %v465, %v238
    %v478 = vpack.c.bf16 %v467, %v240
    %v479 = vld [vmem:[%s3 + $0x40] sm:$0xff]
    %v480 = vld [vmem:[%s3 + $0x48] sm:$0xff]
    %v481 = vld [vmem:[%s3 + $0x50] sm:$0xff]
    %v482 = vld [vmem:[%s3 + $0x58] sm:$0xff]
    %484 = vset.pattern.permute.xlu0 0
    %485 = vperm.xlu0 %484, %v479
    %v486 = vpop.permute.xlu0 %485
    %489 = vset.pattern.permute.xlu0 0
    %490 = vperm.xlu0 %489, %v480
    %v491 = vpop.permute.xlu0 %490
    %494 = vset.pattern.permute.xlu0 0
    %495 = vperm.xlu0 %494, %v481
    %v496 = vpop.permute.xlu0 %495
    %499 = vset.pattern.permute.xlu0 0
    %500 = vperm.xlu0 %499, %v482
    %v501 = vpop.permute.xlu0 %500
    %v504 = vsel %vm55, %v475, 0
    %v507 = vsel %vm55, %v476, 0
    %509 = vmatprep.subr.bf16.mxu0 0
    %510 = vmatpush1.bf16.msra.mxu0 0
    %511 = vmatprep.subr.bf16.mxu0 0
    %512 = vmatpush1.bf16.msra.mxu0 0
    %513 = vmatprep.subr.bf16.mxu0 0
    %514 = vmatpush1.bf16.msra.mxu0 0
    %515 = vmatprep.subr.bf16.mxu0 0
    %516 = vmatpush1.bf16.msra.mxu0 0
    %517 = vmatprep.subr.bf16.mxu0 0
    %518 = vmatpush1.bf16.msra.mxu0 0
    %519 = vmatprep.subr.bf16.mxu0 0
    %520 = vmatpush1.bf16.msra.mxu0 0
    %521 = vmatprep.subr.bf16.mxu0 0
    %522 = vmatpush1.bf16.msra.mxu0 0
    %523 = vmatprep.subr.bf16.mxu0 %v478
    %524 = vmatpush1.bf16.msra.mxu0 %v477
    %525 = vmatprep.subr.bf16.mxu0 0
    %526 = vmatpush2.bf16.msra.mxu0 0
    %527 = vmatprep.subr.bf16.mxu0 0
    %528 = vmatpush2.bf16.msra.mxu0 0
    %529 = vmatprep.subr.bf16.mxu0 0
    %530 = vmatpush2.bf16.msra.mxu0 0
    %531 = vmatprep.subr.bf16.mxu0 0
    %532 = vmatpush2.bf16.msra.mxu0 0
    %533 = vmatprep.subr.bf16.mxu0 0
    %534 = vmatpush2.bf16.msra.mxu0 0
    %535 = vmatprep.subr.bf16.mxu0 0
    %536 = vmatpush2.bf16.msra.mxu0 0
    %537 = vmatprep.subr.bf16.mxu0 0
    %538 = vmatpush2.bf16.msra.mxu0 0
    %539 = vmatprep.subr.bf16.mxu0 0
    %540 = vmatpush2.bf16.msra.mxu0 0
    %541 = vmatprep.mubr.bf16.mxu0 0
    %542 = vmatmul.mubr.bf16.gmra.mxu0 %v504
    %v543 = vpop.f32.mrf.mxu0
    %v544 = vadd.f32 %v486, %v543
    %v545 = vpop.f32.mrf.mxu0
    %v546 = vadd.f32 %v486, %v545
    %v547 = vpop.f32.mrf.mxu0
    %v548 = vadd.f32 %v491, %v547
    %v549 = vpop.f32.mrf.mxu0
    %v550 = vadd.f32 %v491, %v549
    %551 = vmatprep.mubr.bf16.mxu0 0
    %552 = vmatmul.mubr.bf16.gmra.mxu0 %v507
    %v553 = vpop.f32.mrf.mxu0
    %v554 = vadd.f32 %v496, %v553
    %v555 = vpop.f32.mrf.mxu0
    %v556 = vadd.f32 %v496, %v555
    %v557 = vpop.f32.mrf.mxu0
    %v558 = vadd.f32 %v501, %v557
    %v559 = vpop.f32.mrf.mxu0
    %v560 = vadd.f32 %v501, %v559
    %561 = vdwg.mxu0
    %v562 = vmul.f32 %v544, 0.5
    %v563 = vmul.f32 %v546, 0.5
    %v564 = vmul.f32 %v548, 0.5
    %v565 = vmul.f32 %v550, 0.5
    %v566 = vmul.f32 %v554, 0.5
    %v567 = vmul.f32 %v556, 0.5
    %v568 = vmul.f32 %v558, 0.5
    %v569 = vmul.f32 %v560, 0.5
    %v570 = vmul.f32 %v544, 0.044715
    %v571 = vmul.f32 %v546, 0.044715
    %v572 = vmul.f32 %v548, 0.044715
    %v573 = vmul.f32 %v550, 0.044715
    %v574 = vmul.f32 %v554, 0.044715
    %v575 = vmul.f32 %v556, 0.044715
    %v576 = vmul.f32 %v558, 0.044715
    %v577 = vmul.f32 %v560, 0.044715
    %v578 = vmul.f32 %v570, %v544
    %v579 = vmul.f32 %v571, %v546
    %v580 = vmul.f32 %v572, %v548
    %v581 = vmul.f32 %v573, %v550
    %v582 = vmul.f32 %v574, %v554
    %v583 = vmul.f32 %v575, %v556
    %v584 = vmul.f32 %v576, %v558
    %v585 = vmul.f32 %v577, %v560
    %v586 = vmul.f32 %v578, %v544
    %v587 = vmul.f32 %v579, %v546
    %v588 = vmul.f32 %v580, %v548
    %v589 = vmul.f32 %v581, %v550
    %v590 = vmul.f32 %v582, %v554
    %v591 = vmul.f32 %v583, %v556
    %v592 = vmul.f32 %v584, %v558
    %v593 = vmul.f32 %v585, %v560
    %v594 = vadd.f32 %v544, %v586
    %v595 = vadd.f32 %v546, %v587
    %v596 = vadd.f32 %v548, %v588
    %v597 = vadd.f32 %v550, %v589
    %v598 = vadd.f32 %v554, %v590
    %v599 = vadd.f32 %v556, %v591
    %v600 = vadd.f32 %v558, %v592
    %v601 = vadd.f32 %v560, %v593
    %v602 = vmul.f32 %v594, 0.7978846
    %v603 = vmul.f32 %v595, 0.7978846
    %v604 = vmul.f32 %v596, 0.7978846
    %v605 = vmul.f32 %v597, 0.7978846
    %v606 = vmul.f32 %v598, 0.7978846
    %v607 = vmul.f32 %v599, 0.7978846
    %v608 = vmul.f32 %v600, 0.7978846
    %v609 = vmul.f32 %v601, 0.7978846
    %v610 = vtanh.pop %v602
    %v611 = vtanh.pop %v603
    %v612 = vtanh.pop %v604
    %v613 = vtanh.pop %v605
    %v614 = vtanh.pop %v606
    %v615 = vtanh.pop %v607
    %v616 = vtanh.pop %v608
    %v617 = vtanh.pop %v609
    %v618 = vadd.f32 %v610, 1.0
    %v619 = vadd.f32 %v611, 1.0
    %v620 = vadd.f32 %v612, 1.0
    %v621 = vadd.f32 %v613, 1.0
    %v622 = vadd.f32 %v614, 1.0
    %v623 = vadd.f32 %v615, 1.0
    %v624 = vadd.f32 %v616, 1.0
    %v625 = vadd.f32 %v617, 1.0
    %v626 = vmul.f32 %v562, %v618
    %v627 = vmul.f32 %v563, %v619
    %v628 = vmul.f32 %v564, %v620
    %v629 = vmul.f32 %v565, %v621
    %v630 = vmul.f32 %v566, %v622
    %v631 = vmul.f32 %v567, %v623
    %v632 = vmul.f32 %v568, %v624
    %v633 = vmul.f32 %v569, %v625
    %v634 = vld [vmem:[%s2 + $0x10] sm:$0xff]
    %v635 = vld [vmem:[%s2 + $0x18] sm:$0xff]
    %v636 = vpack.c.bf16 %v635, %v634
    %v637 = vpack.c.bf16 %v628, %v626
    %v638 = vpack.c.bf16 %v629, %v627
    %v639 = vpack.c.bf16 %v632, %v630
    %v640 = vpack.c.bf16 %v633, %v631
    %v641 = vld [vmem:[%s3 + $0x70] sm:$0xff]
    %v642 = vld [vmem:[%s3 + $0x78] sm:$0xff]
    %644 = vset.pattern.permute.xlu0 0
    %645 = vperm.xlu0 %644, %v641
    %v646 = vpop.permute.xlu0 %645
    %649 = vset.pattern.permute.xlu0 0
    %650 = vperm.xlu0 %649, %v642
    %v651 = vpop.permute.xlu0 %650
    %v654 = vsel %vm199, %v636, 0
    %656 = vmatprep.subr.bf16.mxu0 0
    %657 = vmatpush1.bf16.msra.mxu0 0
    %658 = vmatprep.subr.bf16.mxu0 0
    %659 = vmatpush1.bf16.msra.mxu0 0
    %660 = vmatprep.subr.bf16.mxu0 0
    %661 = vmatpush1.bf16.msra.mxu0 0
    %662 = vmatprep.subr.bf16.mxu0 0
    %663 = vmatpush1.bf16.msra.mxu0 0
    %664 = vmatprep.subr.bf16.mxu0 0
    %665 = vmatpush1.bf16.msra.mxu0 0
    %666 = vmatprep.subr.bf16.mxu0 0
    %667 = vmatpush1.bf16.msra.mxu0 0
    %668 = vmatprep.subr.bf16.mxu0 %v640
    %669 = vmatpush1.bf16.msra.mxu0 %v639
    %670 = vmatprep.subr.bf16.mxu0 %v638
    %671 = vmatpush1.bf16.msra.mxu0 %v637
    %672 = vmatprep.subr.bf16.mxu0 0
    %673 = vmatpush2.bf16.msra.mxu0 0
    %674 = vmatprep.subr.bf16.mxu0 0
    %675 = vmatpush2.bf16.msra.mxu0 0
    %676 = vmatprep.subr.bf16.mxu0 0
    %677 = vmatpush2.bf16.msra.mxu0 0
    %678 = vmatprep.subr.bf16.mxu0 0
    %679 = vmatpush2.bf16.msra.mxu0 0
    %680 = vmatprep.subr.bf16.mxu0 0
    %681 = vmatpush2.bf16.msra.mxu0 0
    %682 = vmatprep.subr.bf16.mxu0 0
    %683 = vmatpush2.bf16.msra.mxu0 0
    %684 = vmatprep.subr.bf16.mxu0 0
    %685 = vmatpush2.bf16.msra.mxu0 0
    %686 = vmatprep.subr.bf16.mxu0 0
    %687 = vmatpush2.bf16.msra.mxu0 0
    %688 = vmatprep.mubr.bf16.mxu0 0
    %689 = vmatmul.mubr.bf16.gmra.mxu0 %v654
    %v690 = vpop.f32.mrf.mxu0
    %v691 = vadd.f32 %v646, %v690
    %v692 = vpop.f32.mrf.mxu0
    %v693 = vadd.f32 %v646, %v692
    %v694 = vpop.f32.mrf.mxu0
    %v695 = vadd.f32 %v651, %v694
    %v696 = vpop.f32.mrf.mxu0
    %v697 = vadd.f32 %v651, %v696
    %698 = vdwg.mxu0
    %699 = vst [vmem:[#allocation2] sm:$0xff] %v238
    %700 = vst [vmem:[#allocation2 + $0x8] sm:$0xff] %v240
    %701 = vst [vmem:[#allocation2 + $0x10] sm:$0xff] %v465
    %702 = vst [vmem:[#allocation2 + $0x18] sm:$0xff] %v467
    %703 = vst [vmem:[#allocation2 + $0x20] sm:$0xff] %v691
    %704 = vst [vmem:[#allocation2 + $0x28] sm:$0xff] %v693
    %705 = vst [vmem:[#allocation2 + $0x30] sm:$0xff] %v695
    %706 = vst [vmem:[#allocation2 + $0x38] sm:$0xff] %v697
    // Predicated region
    $region18: #{tpu_custom_call.1} parent=1 // pred_check
      _
    $region19: #{tpu_custom_call.1} parent=1 // pred_check_branch
      %708 = sbr.rel (0) target = $region21
    $region20: #{tpu_custom_call.1} parent=1 // pred_region
      %s710 = ssub.s32 1024, 1024
      %711 = vsyncadd [#allocation3], %s710
      %s712 = sshll.u32 [#allocation2], 4
      %s713 = int_to_ptr.vmem [resolvable:$true] %s712
      %718 = dma.vmem_to_hbm [thread:$0]  %s713, 1024, %s4, [#allocation3], 256, 256, 16
    $region21: #{tpu_custom_call.1} parent=1 // pred_fallthru
      _
    // Predicated region
    $region22: #{tpu_custom_call.1} parent=1 // pred_check
      _
    $region23: #{tpu_custom_call.1} parent=1 // pred_check_branch
      %720 = sbr.rel (0) target = $region25
    $region24: #{tpu_custom_call.1} parent=1 // pred_region
      %721 = dma.done [#allocation3], 1024
    $region25: #{tpu_custom_call.1} parent=1 // pred_fallthru
      _
    %722 = vsyncpa [#allocation3], 1

</llo_original>
